<compile_context>
chip_gen: v6e
topology: v6e:2x2x1
jax: 0.10.0
libtpu: 0.0.40
codegen_flags: <defaults>
</compile_context>

<pallas_src>
import functools

import jax
import jax.numpy as jnp
from jax.experimental import pallas as pl
from jax.experimental.pallas import tpu as pltpu

EPS = 1e-5
LANE = 128      # lane width: feature-dim padding granularity
SUBLANE = 8     # f32 sublane width: batch-dim padding granularity

# Conservative cross-generation scoped-VMEM cap: v7x has only 64 MiB/TC, so never
# request more than 48 MiB (v5e/v6e could go to ~100 MiB but never need it here).
_VMEM_CAP_BYTES = 48 * 1024 * 1024
_VMEM_FLOOR_BYTES = 32 * 1024 * 1024   # == default scoped limit on v6e/v7x


def _round_up(v, m):
    return ((v + m - 1) // m) * m


def _pad2d(a, rows, cols):
    r, c = a.shape
    return jnp.pad(a, ((0, rows - r), (0, cols - c)))


def mlp_decoder_kernel(
    x_ref,                              # (Npad, Ipad) f32, VMEM
    w1_hbm, w2_hbm, w3_hbm, w4_hbm,     # per-layer padded weights, HBM (pl.ANY)
    v1_ref, v2_ref, v3_ref,             # (3, D) f32 [bias; gamma; beta], VMEM
    b4_ref,                             # (1, Bpad) f32 fc4 bias, VMEM
    o_ref,                              # (Npad, Bpad) f32, VMEM
    w1_buf, w2_buf, w3_buf, w4_buf,     # per-layer VMEM weight scratch
    sem,                                # DMA semaphores (4,)
    *, n_real, mxu_dtype,
):
    # --- manual weight prefetch: issue all HBM->VMEM weight DMAs up front ----
    # Only w1's transfer is exposed latency; w2/w3/w4 stream in underneath the
    # earlier layers' compute (a layer grid is not expressible here because each
    # layer has a different (Din, Dout)).
    cp1 = pltpu.make_async_copy(w1_hbm, w1_buf, sem.at[0]); cp1.start()
    cp2 = pltpu.make_async_copy(w2_hbm, w2_buf, sem.at[1]); cp2.start()
    cp3 = pltpu.make_async_copy(w3_hbm, w3_buf, sem.at[2]); cp3.start()
    cp4 = pltpu.make_async_copy(w4_hbm, w4_buf, sem.at[3]); cp4.start()

    n_pad = x_ref.shape[0]
    inv_n = 1.0 / float(n_real)
    # Masked reduction row: zeros in batch-padding positions keep BN statistics
    # exact over the real batch (padded rows contribute nothing to mean/var).
    mask_row = (jax.lax.broadcasted_iota(jnp.int32, (1, n_pad), 1)
                < n_real).astype(jnp.float32)

    def bn_train(h, gamma, beta):
        # Batch reductions on the MXU; statistics & normalization stay f32.
        mean = jnp.dot(mask_row, h, preferred_element_type=jnp.float32) * inv_n
        centered = h - mean                       # computed once, reused
        var = jnp.dot(mask_row, centered * centered,
                      preferred_element_type=jnp.float32) * inv_n   # biased var
        inv = jax.lax.rsqrt(var + EPS)
        return centered * (inv * gamma) + beta

    def linear(h, w_buf, bias):
        # MXU operands in mxu_dtype (bf16 by default), f32 accumulation.
        return jnp.dot(h.astype(mxu_dtype), w_buf[...],
                       preferred_element_type=jnp.float32) + bias

    x = x_ref[...]

    cp1.wait()
    h = jnp.maximum(linear(x, w1_buf, v1_ref[0:1, :]), 0.0)
    h = bn_train(h, v1_ref[1:2, :], v1_ref[2:3, :])

    cp2.wait()
    h = jnp.maximum(linear(h, w2_buf, v2_ref[0:1, :]), 0.0)
    h = bn_train(h, v2_ref[1:2, :], v2_ref[2:3, :])

    cp3.wait()
    h = jnp.maximum(linear(h, w3_buf, v3_ref[0:1, :]), 0.0)
    h = bn_train(h, v3_ref[1:2, :], v3_ref[2:3, :])

    cp4.wait()
    # Output columns are a full 128-multiple -> lane-dense unmasked stores.
    o_ref[...] = linear(h, w4_buf, b4_ref[0:1, :]).astype(o_ref.dtype)


def _pack_padded_params(params, use_bf16):
    """Per-layer zero-padding: each feature dim padded independently to a
    multiple of 128 (no common max-D inflation). Weights stored in the MXU
    operand dtype; bias/gamma/beta kept f32."""
    in_dim, hidden = params["w1"].shape
    out_dim = params["w3"].shape[1]
    binary = params["w4"].shape[1]
    ip, hp, op, bp = (_round_up(v, LANE) for v in (in_dim, hidden, out_dim, binary))
    wdt = jnp.bfloat16 if use_bf16 else jnp.float32

    weights = (
        _pad2d(params["w1"], ip, hp).astype(wdt),
        _pad2d(params["w2"], hp, hp).astype(wdt),
        _pad2d(params["w3"], hp, op).astype(wdt),
        _pad2d(params["w4"], op, bp).astype(wdt),
    )

    def vec3(b, g, be, d):
        return jnp.concatenate(
            [_pad2d(b, 1, d), _pad2d(g, 1, d), _pad2d(be, 1, d)], axis=0)

    vecs = (
        vec3(params["b1"], params["g1"], params["be1"], hp),
        vec3(params["b2"], params["g2"], params["be2"], hp),
        vec3(params["b3"], params["g3"], params["be3"], op),
        _pad2d(params["b4"], 1, bp),
    )
    return weights, vecs, (ip, hp, op, bp)


def mlp_decoder(x, params, use_bf16=True):
    """Returns (N, binary) f32. Whole batch kept resident in one block (no grid),
    which keeps the training-mode BN statistics exact over the full batch."""
    n, _ = x.shape
    binary = params["w4"].shape[1]
    wdt = jnp.bfloat16 if use_bf16 else jnp.float32
    weights, vecs, (ip, hp, op, bp) = _pack_padded_params(params, use_bf16)

    npad = _round_up(n, SUBLANE)
    x_pad = _pad2d(x.astype(jnp.float32), npad, ip)

    # Static VMEM footprint estimate: weights + (double-buffered) vectors / IO
    # + ~6 live (Npad, Dmax) f32 activation temporaries (h, centered, squares,
    # normalized, casts).
    wbytes = sum(int(w.size) * w.dtype.itemsize for w in weights)
    vbytes = sum(int(v.size) * 4 for v in vecs)
    iobytes = (npad * ip + npad * bp) * 4
    actbytes = 6 * npad * max(ip, hp, op, bp) * 4
    est = wbytes + 2 * (vbytes + iobytes) + actbytes
    if est > _VMEM_CAP_BYTES:
        # TODO(synk): for batches/widths whose working set outgrows VMEM (hit at
        # roughly half the batch threshold on v7x's 64 MiB), add a batch grid
        # marked "parallel" (uses both v7x TensorCores) with a two-pass BN that
        # accumulates masked sum / sum-of-squares over an "arbitrary" axis.
        raise NotImplementedError(
            f"single-block working set ({est} B) exceeds the VMEM budget")
    vmem_limit = int(min(_VMEM_CAP_BYTES, max(est, _VMEM_FLOOR_BYTES)))

    vmem = pl.BlockSpec(memory_space=pltpu.VMEM)
    hbm = pl.BlockSpec(memory_space=pl.ANY)

    out_pad = pl.pallas_call(
        functools.partial(mlp_decoder_kernel, n_real=n, mxu_dtype=wdt),
        out_shape=jax.ShapeDtypeStruct((npad, bp), jnp.float32),
        in_specs=[vmem, hbm, hbm, hbm, hbm, vmem, vmem, vmem, vmem],
        out_specs=vmem,
        scratch_shapes=[
            pltpu.VMEM((ip, hp), wdt),
            pltpu.VMEM((hp, hp), wdt),
            pltpu.VMEM((hp, op), wdt),
            pltpu.VMEM((op, bp), wdt),
            pltpu.SemaphoreType.DMA((4,)),
        ],
        compiler_params=pltpu.CompilerParams(vmem_limit_bytes=vmem_limit),
    )(x_pad, *weights, *vecs)
    return out_pad[:n, :binary]


def init_params(key, in_dim, hidden_dim, out_dim, binary=1):
    """Deterministic synthetic init. Linear weights stored as (in, out)."""
    ks = jax.random.split(key, 8)

    def lin(kw, kb, fan_in, fan_out):
        bound = 1.0 / jnp.sqrt(jnp.float32(fan_in))
        w = jax.random.uniform(kw, (fan_in, fan_out), jnp.float32, -bound, bound)
        b = jax.random.uniform(kb, (1, fan_out), jnp.float32, -bound, bound)
        return w, b

    w1, b1 = lin(ks[0], ks[1], in_dim, hidden_dim)
    w2, b2 = lin(ks[2], ks[3], hidden_dim, hidden_dim)
    w3, b3 = lin(ks[4], ks[5], hidden_dim, out_dim)
    w4, b4 = lin(ks[6], ks[7], out_dim, binary)

    # BatchNorm affine params (PyTorch default: gamma=1, beta=0).
    return dict(
        w1=w1, b1=b1, g1=jnp.ones((1, hidden_dim), jnp.float32), be1=jnp.zeros((1, hidden_dim), jnp.float32),
        w2=w2, b2=b2, g2=jnp.ones((1, hidden_dim), jnp.float32), be2=jnp.zeros((1, hidden_dim), jnp.float32),
        w3=w3, b3=b3, g3=jnp.ones((1, out_dim), jnp.float32), be3=jnp.zeros((1, out_dim), jnp.float32),
        w4=w4, b4=b4,
    )


def mlp_decoder_ref(x, p, use_bf16=True):
    """Pure-JAX reference (training-mode BatchNorm1d, biased variance).
    use_bf16=False is the exact PyTorch-f32 forward; use_bf16=True mirrors the
    kernel's cast points (bf16 MXU operands, f32 accumulation / BN math)."""
    wdt = jnp.bfloat16 if use_bf16 else jnp.float32

    def dot(a, w):
        return jnp.dot(a.astype(wdt), w.astype(wdt),
                       preferred_element_type=jnp.float32)

    def bn(h, g, b):
        m = jnp.mean(h, axis=0, keepdims=True)
        v = jnp.mean((h - m) ** 2, axis=0, keepdims=True)
        return (h - m) / jnp.sqrt(v + EPS) * g + b

    h = bn(jnp.maximum(dot(x, p["w1"]) + p["b1"], 0.0), p["g1"], p["be1"])
    h = bn(jnp.maximum(dot(h, p["w2"]) + p["b2"], 0.0), p["g2"], p["be2"])
    h = bn(jnp.maximum(dot(h, p["w3"]) + p["b3"], 0.0), p["g3"], p["be3"])
    return dot(h, p["w4"]) + p["b4"]


if __name__ == "__main__":
    # TODO(synk): kDTI's drug_module / protein_module / bcb attention are built
    # dynamically from config and are unspecified here; only the MLPDecoder head
    # is implemented as a kernel.
    key = jax.random.PRNGKey(0)
    k_x, k_p = jax.random.split(key)

    N, IN_DIM, HIDDEN, OUT_DIM, BINARY = 8, 16, 32, 16, 1
    x = jax.random.normal(k_x, (N, IN_DIM), jnp.float32)
    params = init_params(k_p, IN_DIM, HIDDEN, OUT_DIM, BINARY)

    # f32-MXU path: matches the PyTorch-semantics reference tightly.
    out_f32 = jax.block_until_ready(mlp_decoder(x, params, use_bf16=False))
    ref_f32 = mlp_decoder_ref(x, params, use_bf16=False)
    assert out_f32.shape == (N, BINARY), out_f32.shape
    assert jnp.allclose(out_f32, ref_f32, atol=1e-4, rtol=1e-4), \
        float(jnp.max(jnp.abs(out_f32 - ref_f32)))

    # bf16-MXU path (default: MXU-native rate, half the weight DMA/VMEM):
    # compared against a reference with identical cast points.
    out_bf16 = jax.block_until_ready(mlp_decoder(x, params, use_bf16=True))
    ref_bf16 = mlp_decoder_ref(x, params, use_bf16=True)
    assert out_bf16.shape == (N, BINARY), out_bf16.shape
    assert jnp.allclose(out_bf16, ref_bf16, atol=1e-3, rtol=1e-3), \
        float(jnp.max(jnp.abs(out_bf16 - ref_bf16)))

    print("KERNEL_OK")
</pallas_src>

<mosaic_0001>
module attributes {stable_mosaic.version = 11 : i64} {
  func.func @mlp_decoder_kernel(%arg0: memref<8x128xf32, #tpu.memory_space<vmem>>, %arg1: memref<128x128xf32, #tpu.memory_space<any>>, %arg2: memref<128x128xf32, #tpu.memory_space<any>>, %arg3: memref<128x128xf32, #tpu.memory_space<any>>, %arg4: memref<128x128xf32, #tpu.memory_space<any>>, %arg5: memref<3x128xf32, #tpu.memory_space<vmem>>, %arg6: memref<3x128xf32, #tpu.memory_space<vmem>>, %arg7: memref<3x128xf32, #tpu.memory_space<vmem>>, %arg8: memref<1x128xf32, #tpu.memory_space<vmem>>, %arg9: memref<8x128xf32, #tpu.memory_space<vmem>>, %arg10: memref<128x128xf32, #tpu.memory_space<vmem>>, %arg11: memref<128x128xf32, #tpu.memory_space<vmem>>, %arg12: memref<128x128xf32, #tpu.memory_space<vmem>>, %arg13: memref<128x128xf32, #tpu.memory_space<vmem>>, %arg14: memref<4x!tpu.dma_semaphore, #tpu.memory_space<semaphore_mem>>) attributes {dimension_semantics = [], scalar_prefetch = 0 : i64, scratch_operands = 5 : i64, tpu.core_type = #tpu.core_type<tc>} {
    %c0_i32 = arith.constant 0 : i32
    %0 = tpu.memref_slice %arg14[%c0_i32] : memref<4x!tpu.dma_semaphore, #tpu.memory_space<semaphore_mem>> -> memref<1x!tpu.dma_semaphore, #tpu.memory_space<semaphore_mem>>
    %1 = tpu.memref_squeeze %0 : memref<1x!tpu.dma_semaphore, #tpu.memory_space<semaphore_mem>> -> memref<!tpu.dma_semaphore, #tpu.memory_space<semaphore_mem>>
    tpu.enqueue_dma source(%arg1 : memref<128x128xf32, #tpu.memory_space<any>>) target(%arg10 : memref<128x128xf32, #tpu.memory_space<vmem>>) target_semaphore(%1 : memref<!tpu.dma_semaphore, #tpu.memory_space<semaphore_mem>>)
    %c1_i32 = arith.constant 1 : i32
    %2 = tpu.memref_slice %arg14[%c1_i32] : memref<4x!tpu.dma_semaphore, #tpu.memory_space<semaphore_mem>> -> memref<1x!tpu.dma_semaphore, #tpu.memory_space<semaphore_mem>>
    %3 = tpu.memref_squeeze %2 : memref<1x!tpu.dma_semaphore, #tpu.memory_space<semaphore_mem>> -> memref<!tpu.dma_semaphore, #tpu.memory_space<semaphore_mem>>
    tpu.enqueue_dma source(%arg2 : memref<128x128xf32, #tpu.memory_space<any>>) target(%arg11 : memref<128x128xf32, #tpu.memory_space<vmem>>) target_semaphore(%3 : memref<!tpu.dma_semaphore, #tpu.memory_space<semaphore_mem>>)
    %c2_i32 = arith.constant 2 : i32
    %4 = tpu.memref_slice %arg14[%c2_i32] : memref<4x!tpu.dma_semaphore, #tpu.memory_space<semaphore_mem>> -> memref<1x!tpu.dma_semaphore, #tpu.memory_space<semaphore_mem>>
    %5 = tpu.memref_squeeze %4 : memref<1x!tpu.dma_semaphore, #tpu.memory_space<semaphore_mem>> -> memref<!tpu.dma_semaphore, #tpu.memory_space<semaphore_mem>>
    tpu.enqueue_dma source(%arg3 : memref<128x128xf32, #tpu.memory_space<any>>) target(%arg12 : memref<128x128xf32, #tpu.memory_space<vmem>>) target_semaphore(%5 : memref<!tpu.dma_semaphore, #tpu.memory_space<semaphore_mem>>)
    %c3_i32 = arith.constant 3 : i32
    %6 = tpu.memref_slice %arg14[%c3_i32] : memref<4x!tpu.dma_semaphore, #tpu.memory_space<semaphore_mem>> -> memref<1x!tpu.dma_semaphore, #tpu.memory_space<semaphore_mem>>
    %7 = tpu.memref_squeeze %6 : memref<1x!tpu.dma_semaphore, #tpu.memory_space<semaphore_mem>> -> memref<!tpu.dma_semaphore, #tpu.memory_space<semaphore_mem>>
    tpu.enqueue_dma source(%arg4 : memref<128x128xf32, #tpu.memory_space<any>>) target(%arg13 : memref<128x128xf32, #tpu.memory_space<vmem>>) target_semaphore(%7 : memref<!tpu.dma_semaphore, #tpu.memory_space<semaphore_mem>>)
    %8 = tpu.iota {dimensions = array<i32: 1>} : vector<1x8xi32>
    %c8_i32 = arith.constant 8 : i32
    %9 = vector.broadcast %c8_i32 : i32 to vector<1x8xi32>
    %10 = arith.cmpi slt, %8, %9 : vector<1x8xi32>
    %11 = arith.extui %10 : vector<1x8xi1> to vector<1x8xi32>
    %12 = arith.sitofp %11 : vector<1x8xi32> to vector<1x8xf32>
    %c0 = arith.constant 0 : index
    %c0_0 = arith.constant 0 : index
    %13 = vector.load %arg0[%c0, %c0_0] : memref<8x128xf32, #tpu.memory_space<vmem>>, vector<8x128xf32>
    %c0_i32_1 = arith.constant 0 : i32
    %14 = tpu.memref_slice %arg14[%c0_i32_1] : memref<4x!tpu.dma_semaphore, #tpu.memory_space<semaphore_mem>> -> memref<1x!tpu.dma_semaphore, #tpu.memory_space<semaphore_mem>>
    %15 = tpu.memref_squeeze %14 : memref<1x!tpu.dma_semaphore, #tpu.memory_space<semaphore_mem>> -> memref<!tpu.dma_semaphore, #tpu.memory_space<semaphore_mem>>
    tpu.wait_dma2 semaphore(%15 : memref<!tpu.dma_semaphore, #tpu.memory_space<semaphore_mem>>) src(%arg1 : memref<128x128xf32, #tpu.memory_space<any>>) dst(%arg10 : memref<128x128xf32, #tpu.memory_space<vmem>>)
    %c0_2 = arith.constant 0 : index
    %c0_3 = arith.constant 0 : index
    %16 = vector.load %arg5[%c0_2, %c0_3] : memref<3x128xf32, #tpu.memory_space<vmem>>, vector<1x128xf32>
    %c0_4 = arith.constant 0 : index
    %c0_5 = arith.constant 0 : index
    %17 = vector.load %arg10[%c0_4, %c0_5] : memref<128x128xf32, #tpu.memory_space<vmem>>, vector<128x128xf32>
    %cst = arith.constant dense<0.000000e+00> : vector<8x128xf32>
    %18 = tpu.matmul %13, %17, %cst {dimension_numbers = #tpu.dot_dimension_numbers<[1], [0], [0], [1], [0, 0, 1, 1], [], []>} : vector<8x128xf32>, vector<128x128xf32>, vector<8x128xf32> -> vector<8x128xf32>
    %19 = vector.broadcast %16 : vector<1x128xf32> to vector<8x128xf32>
    %20 = arith.addf %18, %19 : vector<8x128xf32>
    %cst_6 = arith.constant 0.000000e+00 : f32
    %21 = vector.broadcast %cst_6 : f32 to vector<8x128xf32>
    %22 = arith.maximumf %20, %21 : vector<8x128xf32>
    %c1 = arith.constant 1 : index
    %c0_7 = arith.constant 0 : index
    %23 = vector.load %arg5[%c1, %c0_7] : memref<3x128xf32, #tpu.memory_space<vmem>>, vector<1x128xf32>
    %c2 = arith.constant 2 : index
    %c0_8 = arith.constant 0 : index
    %24 = vector.load %arg5[%c2, %c0_8] : memref<3x128xf32, #tpu.memory_space<vmem>>, vector<1x128xf32>
    %cst_9 = arith.constant dense<0.000000e+00> : vector<1x128xf32>
    %25 = tpu.matmul %12, %22, %cst_9 {dimension_numbers = #tpu.dot_dimension_numbers<[1], [0], [0], [1], [0, 0, 1, 1], [], []>} : vector<1x8xf32>, vector<8x128xf32>, vector<1x128xf32> -> vector<1x128xf32>
    %cst_10 = arith.constant 1.250000e-01 : f32
    %26 = vector.broadcast %cst_10 : f32 to vector<1x128xf32>
    %27 = arith.mulf %25, %26 : vector<1x128xf32>
    %28 = vector.broadcast %27 : vector<1x128xf32> to vector<8x128xf32>
    %29 = arith.subf %22, %28 : vector<8x128xf32>
    %30 = arith.mulf %29, %29 : vector<8x128xf32>
    %cst_11 = arith.constant dense<0.000000e+00> : vector<1x128xf32>
    %31 = tpu.matmul %12, %30, %cst_11 {dimension_numbers = #tpu.dot_dimension_numbers<[1], [0], [0], [1], [0, 0, 1, 1], [], []>} : vector<1x8xf32>, vector<8x128xf32>, vector<1x128xf32> -> vector<1x128xf32>
    %cst_12 = arith.constant 1.250000e-01 : f32
    %32 = vector.broadcast %cst_12 : f32 to vector<1x128xf32>
    %33 = arith.mulf %31, %32 : vector<1x128xf32>
    %cst_13 = arith.constant 9.99999974E-6 : f32
    %34 = vector.broadcast %cst_13 : f32 to vector<1x128xf32>
    %35 = arith.addf %33, %34 : vector<1x128xf32>
    %36 = math.rsqrt %35 : vector<1x128xf32>
    %37 = arith.mulf %36, %23 : vector<1x128xf32>
    %38 = vector.broadcast %37 : vector<1x128xf32> to vector<8x128xf32>
    %39 = arith.mulf %29, %38 : vector<8x128xf32>
    %40 = vector.broadcast %24 : vector<1x128xf32> to vector<8x128xf32>
    %41 = arith.addf %39, %40 : vector<8x128xf32>
    %c1_i32_14 = arith.constant 1 : i32
    %42 = tpu.memref_slice %arg14[%c1_i32_14] : memref<4x!tpu.dma_semaphore, #tpu.memory_space<semaphore_mem>> -> memref<1x!tpu.dma_semaphore, #tpu.memory_space<semaphore_mem>>
    %43 = tpu.memref_squeeze %42 : memref<1x!tpu.dma_semaphore, #tpu.memory_space<semaphore_mem>> -> memref<!tpu.dma_semaphore, #tpu.memory_space<semaphore_mem>>
    tpu.wait_dma2 semaphore(%43 : memref<!tpu.dma_semaphore, #tpu.memory_space<semaphore_mem>>) src(%arg2 : memref<128x128xf32, #tpu.memory_space<any>>) dst(%arg11 : memref<128x128xf32, #tpu.memory_space<vmem>>)
    %c0_15 = arith.constant 0 : index
    %c0_16 = arith.constant 0 : index
    %44 = vector.load %arg6[%c0_15, %c0_16] : memref<3x128xf32, #tpu.memory_space<vmem>>, vector<1x128xf32>
    %c0_17 = arith.constant 0 : index
    %c0_18 = arith.constant 0 : index
    %45 = vector.load %arg11[%c0_17, %c0_18] : memref<128x128xf32, #tpu.memory_space<vmem>>, vector<128x128xf32>
    %cst_19 = arith.constant dense<0.000000e+00> : vector<8x128xf32>
    %46 = tpu.matmul %41, %45, %cst_19 {dimension_numbers = #tpu.dot_dimension_numbers<[1], [0], [0], [1], [0, 0, 1, 1], [], []>} : vector<8x128xf32>, vector<128x128xf32>, vector<8x128xf32> -> vector<8x128xf32>
    %47 = vector.broadcast %44 : vector<1x128xf32> to vector<8x128xf32>
    %48 = arith.addf %46, %47 : vector<8x128xf32>
    %cst_20 = arith.constant 0.000000e+00 : f32
    %49 = vector.broadcast %cst_20 : f32 to vector<8x128xf32>
    %50 = arith.maximumf %48, %49 : vector<8x128xf32>
    %c1_21 = arith.constant 1 : index
    %c0_22 = arith.constant 0 : index
    %51 = vector.load %arg6[%c1_21, %c0_22] : memref<3x128xf32, #tpu.memory_space<vmem>>, vector<1x128xf32>
    %c2_23 = arith.constant 2 : index
    %c0_24 = arith.constant 0 : index
    %52 = vector.load %arg6[%c2_23, %c0_24] : memref<3x128xf32, #tpu.memory_space<vmem>>, vector<1x128xf32>
    %cst_25 = arith.constant dense<0.000000e+00> : vector<1x128xf32>
    %53 = tpu.matmul %12, %50, %cst_25 {dimension_numbers = #tpu.dot_dimension_numbers<[1], [0], [0], [1], [0, 0, 1, 1], [], []>} : vector<1x8xf32>, vector<8x128xf32>, vector<1x128xf32> -> vector<1x128xf32>
    %cst_26 = arith.constant 1.250000e-01 : f32
    %54 = vector.broadcast %cst_26 : f32 to vector<1x128xf32>
    %55 = arith.mulf %53, %54 : vector<1x128xf32>
    %56 = vector.broadcast %55 : vector<1x128xf32> to vector<8x128xf32>
    %57 = arith.subf %50, %56 : vector<8x128xf32>
    %58 = arith.mulf %57, %57 : vector<8x128xf32>
    %cst_27 = arith.constant dense<0.000000e+00> : vector<1x128xf32>
    %59 = tpu.matmul %12, %58, %cst_27 {dimension_numbers = #tpu.dot_dimension_numbers<[1], [0], [0], [1], [0, 0, 1, 1], [], []>} : vector<1x8xf32>, vector<8x128xf32>, vector<1x128xf32> -> vector<1x128xf32>
    %cst_28 = arith.constant 1.250000e-01 : f32
    %60 = vector.broadcast %cst_28 : f32 to vector<1x128xf32>
    %61 = arith.mulf %59, %60 : vector<1x128xf32>
    %cst_29 = arith.constant 9.99999974E-6 : f32
    %62 = vector.broadcast %cst_29 : f32 to vector<1x128xf32>
    %63 = arith.addf %61, %62 : vector<1x128xf32>
    %64 = math.rsqrt %63 : vector<1x128xf32>
    %65 = arith.mulf %64, %51 : vector<1x128xf32>
    %66 = vector.broadcast %65 : vector<1x128xf32> to vector<8x128xf32>
    %67 = arith.mulf %57, %66 : vector<8x128xf32>
    %68 = vector.broadcast %52 : vector<1x128xf32> to vector<8x128xf32>
    %69 = arith.addf %67, %68 : vector<8x128xf32>
    %c2_i32_30 = arith.constant 2 : i32
    %70 = tpu.memref_slice %arg14[%c2_i32_30] : memref<4x!tpu.dma_semaphore, #tpu.memory_space<semaphore_mem>> -> memref<1x!tpu.dma_semaphore, #tpu.memory_space<semaphore_mem>>
    %71 = tpu.memref_squeeze %70 : memref<1x!tpu.dma_semaphore, #tpu.memory_space<semaphore_mem>> -> memref<!tpu.dma_semaphore, #tpu.memory_space<semaphore_mem>>
    tpu.wait_dma2 semaphore(%71 : memref<!tpu.dma_semaphore, #tpu.memory_space<semaphore_mem>>) src(%arg3 : memref<128x128xf32, #tpu.memory_space<any>>) dst(%arg12 : memref<128x128xf32, #tpu.memory_space<vmem>>)
    %c0_31 = arith.constant 0 : index
    %c0_32 = arith.constant 0 : index
    %72 = vector.load %arg7[%c0_31, %c0_32] : memref<3x128xf32, #tpu.memory_space<vmem>>, vector<1x128xf32>
    %c0_33 = arith.constant 0 : index
    %c0_34 = arith.constant 0 : index
    %73 = vector.load %arg12[%c0_33, %c0_34] : memref<128x128xf32, #tpu.memory_space<vmem>>, vector<128x128xf32>
    %cst_35 = arith.constant dense<0.000000e+00> : vector<8x128xf32>
    %74 = tpu.matmul %69, %73, %cst_35 {dimension_numbers = #tpu.dot_dimension_numbers<[1], [0], [0], [1], [0, 0, 1, 1], [], []>} : vector<8x128xf32>, vector<128x128xf32>, vector<8x128xf32> -> vector<8x128xf32>
    %75 = vector.broadcast %72 : vector<1x128xf32> to vector<8x128xf32>
    %76 = arith.addf %74, %75 : vector<8x128xf32>
    %cst_36 = arith.constant 0.000000e+00 : f32
    %77 = vector.broadcast %cst_36 : f32 to vector<8x128xf32>
    %78 = arith.maximumf %76, %77 : vector<8x128xf32>
    %c1_37 = arith.constant 1 : index
    %c0_38 = arith.constant 0 : index
    %79 = vector.load %arg7[%c1_37, %c0_38] : memref<3x128xf32, #tpu.memory_space<vmem>>, vector<1x128xf32>
    %c2_39 = arith.constant 2 : index
    %c0_40 = arith.constant 0 : index
    %80 = vector.load %arg7[%c2_39, %c0_40] : memref<3x128xf32, #tpu.memory_space<vmem>>, vector<1x128xf32>
    %cst_41 = arith.constant dense<0.000000e+00> : vector<1x128xf32>
    %81 = tpu.matmul %12, %78, %cst_41 {dimension_numbers = #tpu.dot_dimension_numbers<[1], [0], [0], [1], [0, 0, 1, 1], [], []>} : vector<1x8xf32>, vector<8x128xf32>, vector<1x128xf32> -> vector<1x128xf32>
    %cst_42 = arith.constant 1.250000e-01 : f32
    %82 = vector.broadcast %cst_42 : f32 to vector<1x128xf32>
    %83 = arith.mulf %81, %82 : vector<1x128xf32>
    %84 = vector.broadcast %83 : vector<1x128xf32> to vector<8x128xf32>
    %85 = arith.subf %78, %84 : vector<8x128xf32>
    %86 = arith.mulf %85, %85 : vector<8x128xf32>
    %cst_43 = arith.constant dense<0.000000e+00> : vector<1x128xf32>
    %87 = tpu.matmul %12, %86, %cst_43 {dimension_numbers = #tpu.dot_dimension_numbers<[1], [0], [0], [1], [0, 0, 1, 1], [], []>} : vector<1x8xf32>, vector<8x128xf32>, vector<1x128xf32> -> vector<1x128xf32>
    %cst_44 = arith.constant 1.250000e-01 : f32
    %88 = vector.broadcast %cst_44 : f32 to vector<1x128xf32>
    %89 = arith.mulf %87, %88 : vector<1x128xf32>
    %cst_45 = arith.constant 9.99999974E-6 : f32
    %90 = vector.broadcast %cst_45 : f32 to vector<1x128xf32>
    %91 = arith.addf %89, %90 : vector<1x128xf32>
    %92 = math.rsqrt %91 : vector<1x128xf32>
    %93 = arith.mulf %92, %79 : vector<1x128xf32>
    %94 = vector.broadcast %93 : vector<1x128xf32> to vector<8x128xf32>
    %95 = arith.mulf %85, %94 : vector<8x128xf32>
    %96 = vector.broadcast %80 : vector<1x128xf32> to vector<8x128xf32>
    %97 = arith.addf %95, %96 : vector<8x128xf32>
    %c3_i32_46 = arith.constant 3 : i32
    %98 = tpu.memref_slice %arg14[%c3_i32_46] : memref<4x!tpu.dma_semaphore, #tpu.memory_space<semaphore_mem>> -> memref<1x!tpu.dma_semaphore, #tpu.memory_space<semaphore_mem>>
    %99 = tpu.memref_squeeze %98 : memref<1x!tpu.dma_semaphore, #tpu.memory_space<semaphore_mem>> -> memref<!tpu.dma_semaphore, #tpu.memory_space<semaphore_mem>>
    tpu.wait_dma2 semaphore(%99 : memref<!tpu.dma_semaphore, #tpu.memory_space<semaphore_mem>>) src(%arg4 : memref<128x128xf32, #tpu.memory_space<any>>) dst(%arg13 : memref<128x128xf32, #tpu.memory_space<vmem>>)
    %c0_47 = arith.constant 0 : index
    %c0_48 = arith.constant 0 : index
    %100 = vector.load %arg8[%c0_47, %c0_48] : memref<1x128xf32, #tpu.memory_space<vmem>>, vector<1x128xf32>
    %c0_49 = arith.constant 0 : index
    %c0_50 = arith.constant 0 : index
    %101 = vector.load %arg13[%c0_49, %c0_50] : memref<128x128xf32, #tpu.memory_space<vmem>>, vector<128x128xf32>
    %cst_51 = arith.constant dense<0.000000e+00> : vector<8x128xf32>
    %102 = tpu.matmul %97, %101, %cst_51 {dimension_numbers = #tpu.dot_dimension_numbers<[1], [0], [0], [1], [0, 0, 1, 1], [], []>} : vector<8x128xf32>, vector<128x128xf32>, vector<8x128xf32> -> vector<8x128xf32>
    %103 = vector.broadcast %100 : vector<1x128xf32> to vector<8x128xf32>
    %104 = arith.addf %102, %103 : vector<8x128xf32>
    %c0_52 = arith.constant 0 : index
    %c0_53 = arith.constant 0 : index
    %105 = vector.load %arg9[%c0_52, %c0_53] : memref<8x128xf32, #tpu.memory_space<vmem>>, vector<8x128xf32>
    tpu.vector_store %arg9[%c0_52, %c0_53], %104 {strides = array<i32>} : memref<8x128xf32, #tpu.memory_space<vmem>>, vector<8x128xf32>,
    return
  }
}

</mosaic_0001>

<llo_original>
// kernel: tpu_custom_call.1
$region0: #{tpu_custom_call.1}
  #allocation0 [shape = 'u32[]', space=smem, size = 0x4, offset = 0x4, fixed_abs, tag = 'smem constant byte address 0x4 - core index']
  #allocation1 [shape = 'u32[144,128]{1,0:T(1,128)}', space=vmem, size = 0x12000, scoped, tag = 'internal scratch']
  #allocation2 [shape = 'f32[128,128]{1,0:T(8,128)}', space=vmem, size = 0x10000, scoped, tag = 'scratch operand']
  #allocation3 [shape = 'f32[128,128]{1,0:T(8,128)}', space=vmem, size = 0x10000, scoped, tag = 'scratch operand']
  #allocation4 [shape = 'f32[128,128]{1,0:T(8,128)}', space=vmem, size = 0x10000, scoped, tag = 'scratch operand']
  #allocation5 [shape = 'f32[128,128]{1,0:T(8,128)}', space=vmem, size = 0x10000, scoped, tag = 'scratch operand']
  #allocation6 [shape = 's32[4]{0}', space=sflag, size = 0x10, scoped, tag = 'scratch operand']
  #allocation11 [shape = 's32[]', space=sflag, size = 0x4, offset = 0, fixed_abs, tag = 'sflag constant byte address 0x0 - dummy sync flag']
  #allocation12 [shape = 's32[]', space=sflag, size = 0x4, offset = 0, fixed_abs, tag = 'sflag constant byte address 0x0 - dummy sync flag']
  #allocation13 [shape = 'u32[]', space=smem, size = 0x4, offset = 0x44, fixed_abs, tag = 'smem constant byte address 0x44 - assertion arg 0']
  #allocation14 [shape = 'u32[]', space=smem, size = 0x4, offset = 0x48, fixed_abs, tag = 'smem constant byte address 0x48 - assertion arg 1']
  #allocation15 [shape = 's32[]', space=sflag, size = 0x4, offset = 0, fixed_abs, tag = 'sflag constant byte address 0x0 - dummy sync flag']
  #allocation16 [shape = 's32[]', space=sflag, size = 0x4, offset = 0, fixed_abs, tag = 'sflag constant byte address 0x0 - dummy sync flag']
  #allocation17 [shape = 's32[]', space=sflag, size = 0x4, offset = 0, fixed_abs, tag = 'sflag constant byte address 0x0 - dummy sync flag']
  #allocation18 [shape = 's32[]', space=sflag, size = 0x4, offset = 0, fixed_abs, tag = 'sflag constant byte address 0x0 - dummy sync flag']
  #allocation19 [shape = 's32[]', space=sflag, size = 0x4, offset = 0, fixed_abs, tag = 'sflag constant byte address 0x0 - dummy sync flag']
  #allocation20 [shape = 's32[]', space=sflag, size = 0x4, offset = 0, fixed_abs, tag = 'sflag constant byte address 0x0 - dummy sync flag']
  %s0 = inlined_call_operand.hbm [shape: f32[8,128], index: 0, kind: input, shape index: {}]
  %s1 = inlined_call_operand.hbm [shape: f32[128,128], index: 1, kind: input, shape index: {}]
  %s2 = inlined_call_operand.hbm [shape: f32[128,128], index: 2, kind: input, shape index: {}]
  %s3 = inlined_call_operand.hbm [shape: f32[128,128], index: 3, kind: input, shape index: {}]
  %s4 = inlined_call_operand.hbm [shape: f32[128,128], index: 4, kind: input, shape index: {}]
  %s5 = inlined_call_operand.vmem [shape: f32[3,128], index: 5, kind: input, shape index: {}]
  %s6 = inlined_call_operand.vmem [shape: f32[3,128], index: 6, kind: input, shape index: {}]
  %s7 = inlined_call_operand.vmem [shape: f32[3,128], index: 7, kind: input, shape index: {}]
  %s8 = inlined_call_operand.vmem [shape: f32[1,128], index: 8, kind: input, shape index: {}]
  %s9 = inlined_call_operand.hbm [shape: f32[8,128], index: 9, kind: output, shape index: {}]
  %s10 = sld [smem:[#allocation0]]
  $region50: #{tpu_custom_call.1} parent=0
    _
  %s12 = ssub.s32 1, %s10
  %s13 = scalar_select 0, %s12, %s10
  $region1: #{tpu_custom_call.1} parent=0
    #allocation7 [shape = 'u8[4096]{0}', space=vmem, size = 0x1000, scoped, tag = 'input window, operand 0, single buffered']
    #allocation8 [shape = 's32[1]{0}', space=sflag, size = 0x4, scoped, tag = 'scoped memory for tpu_custom_call.1']
    #allocation9 [shape = 's32[1]{0}', space=sflag, size = 0x4, scoped, tag = 'scoped memory for tpu_custom_call.1']
    #allocation10 [shape = 'u8[4096]{0}', space=vmem, size = 0x1000, scoped, tag = 'output window, operand 0, single buffered']
    %14 = vsyncpa [#allocation8], 0
    %15 = vsyncpa [#allocation9], 0
    // Predicated region
    $region2: #{tpu_custom_call.1} parent=1 // pred_check
      _
    $region3: #{tpu_custom_call.1} parent=1 // pred_check_branch
      %17 = sbr.rel (0) target = $region5
    $region4: #{tpu_custom_call.1} parent=1 // pred_region
      %s19 = ssub.s32 128, 128
      %20 = vsyncadd [#allocation8], %s19
      %s22 = sshll.u32 [#allocation7], 4
      %s23 = int_to_ptr.vmem [resolvable:$true] %s22
      %25 = dma.hbm_to_vmem [thread:$0]  %s0, 128, %s23, [#allocation8]
    $region5: #{tpu_custom_call.1} parent=1 // pred_fallthru
      _
    // Predicated region
    $region6: #{tpu_custom_call.1} parent=1 // pred_check
      _
    $region7: #{tpu_custom_call.1} parent=1 // pred_check_branch
      %27 = sbr.rel (0) target = $region9
    $region8: #{tpu_custom_call.1} parent=1 // pred_region
      _
    $region9: #{tpu_custom_call.1} parent=1 // pred_fallthru
      _
    // Predicated region
    $region10: #{tpu_custom_call.1} parent=1 // pred_check
      _
    $region11: #{tpu_custom_call.1} parent=1 // pred_check_branch
      %29 = sbr.rel (0) target = $region13
    $region12: #{tpu_custom_call.1} parent=1 // pred_region
      _
    $region13: #{tpu_custom_call.1} parent=1 // pred_fallthru
      _
    // Predicated region
    $region14: #{tpu_custom_call.1} parent=1 // pred_check
      _
    $region15: #{tpu_custom_call.1} parent=1 // pred_check_branch
      %31 = sbr.rel (0) target = $region17
    $region16: #{tpu_custom_call.1} parent=1 // pred_region
      _
    $region17: #{tpu_custom_call.1} parent=1 // pred_fallthru
      _
    // Predicated region
    $region18: #{tpu_custom_call.1} parent=1 // pred_check
      _
    $region19: #{tpu_custom_call.1} parent=1 // pred_check_branch
      %33 = sbr.rel (0) target = $region21
    $region20: #{tpu_custom_call.1} parent=1 // pred_region
      _
    $region21: #{tpu_custom_call.1} parent=1 // pred_fallthru
      _
    // Predicated region
    $region22: #{tpu_custom_call.1} parent=1 // pred_check
      _
    $region23: #{tpu_custom_call.1} parent=1 // pred_check_branch
      %35 = sbr.rel (0) target = $region25
    $region24: #{tpu_custom_call.1} parent=1 // pred_region
      %36 = dma.done [#allocation8], 128
    $region25: #{tpu_custom_call.1} parent=1 // pred_fallthru
      _
    // Predicated region
    $region26: #{tpu_custom_call.1} parent=1 // pred_check
      _
    $region27: #{tpu_custom_call.1} parent=1 // pred_check_branch
      %38 = sbr.rel target = $region29
    $region28: #{tpu_custom_call.1} parent=1 // pred_region
      %39 = sst [smem:[#allocation13]] [#allocation12]
      %40 = sst [smem:[#allocation14]] [#allocation11]
    $region29: #{tpu_custom_call.1} parent=1 // pred_fallthru
      _
    %42 = shalt.err (0)
    %s44 = sshll.u32 [#allocation2], 4
    %s45 = int_to_ptr.vmem [resolvable:$true] %s44
    %47 = dma.hbm_to_vmem [thread:$0]  %s1, 2048, %s45, [#allocation6]
    %s48 = scalar_lea.sflag [#allocation6], 1
    // Predicated region
    $region30: #{tpu_custom_call.1} parent=1 // pred_check
      _
    $region31: #{tpu_custom_call.1} parent=1 // pred_check_branch
      %50 = sbr.rel target = $region33
    $region32: #{tpu_custom_call.1} parent=1 // pred_region
      %51 = sst [smem:[#allocation13]] [#allocation16]
      %52 = sst [smem:[#allocation14]] [#allocation15]
    $region33: #{tpu_custom_call.1} parent=1 // pred_fallthru
      _
    %54 = shalt.err (0)
    %s56 = sshll.u32 [#allocation3], 4
    %s57 = int_to_ptr.vmem [resolvable:$true] %s56
    %59 = dma.hbm_to_vmem [thread:$0]  %s2, 2048, %s57, %s48
    %s60 = scalar_lea.sflag [#allocation6], 2
    // Predicated region
    $region34: #{tpu_custom_call.1} parent=1 // pred_check
      _
    $region35: #{tpu_custom_call.1} parent=1 // pred_check_branch
      %62 = sbr.rel target = $region37
    $region36: #{tpu_custom_call.1} parent=1 // pred_region
      %63 = sst [smem:[#allocation13]] [#allocation18]
      %64 = sst [smem:[#allocation14]] [#allocation17]
    $region37: #{tpu_custom_call.1} parent=1 // pred_fallthru
      _
    %66 = shalt.err (0)
    %s68 = sshll.u32 [#allocation4], 4
    %s69 = int_to_ptr.vmem [resolvable:$true] %s68
    %71 = dma.hbm_to_vmem [thread:$0]  %s3, 2048, %s69, %s60
    %s72 = scalar_lea.sflag [#allocation6], 3
    // Predicated region
    $region38: #{tpu_custom_call.1} parent=1 // pred_check
      _
    $region39: #{tpu_custom_call.1} parent=1 // pred_check_branch
      %74 = sbr.rel target = $region41
    $region40: #{tpu_custom_call.1} parent=1 // pred_region
      %75 = sst [smem:[#allocation13]] [#allocation20]
      %76 = sst [smem:[#allocation14]] [#allocation19]
    $region41: #{tpu_custom_call.1} parent=1 // pred_fallthru
      _
    %78 = shalt.err (0)
    %s80 = sshll.u32 [#allocation5], 4
    %s81 = int_to_ptr.vmem [resolvable:$true] %s80
    %83 = dma.hbm_to_vmem [thread:$0]  %s4, 2048, %s81, %s72
    %v84 = vlaneseq
    %v85 = vand.u32 %v84, 127
    %vm86 = vcmp.lt.s32.totalorder %v85, 8
    %v87 = vsel %vm86, 1, 0
    %v88 = vcvt.s32.f32 %v87
    %v89 = vld [vmem:[#allocation7] sm:$0xff]
    %s90 = smul.u32 128, 1
    %s91 = sshll.u32 %s90, 4
    %92 = dma.done [#allocation6], %s91
    %v93 = vld [vmem:[%s5] sm:$0x1]
    %v94 = vld [vmem:[#allocation2] sm:$0xff]
    %v95 = vld [vmem:[#allocation2 + $0x8] sm:$0xff]
    %v96 = vld [vmem:[#allocation2 + $0x10] sm:$0xff]
    %v97 = vld [vmem:[#allocation2 + $0x18] sm:$0xff]
    %v98 = vld [vmem:[#allocation2 + $0x20] sm:$0xff]
    %v99 = vld [vmem:[#allocation2 + $0x28] sm:$0xff]
    %v100 = vld [vmem:[#allocation2 + $0x30] sm:$0xff]
    %v101 = vld [vmem:[#allocation2 + $0x38] sm:$0xff]
    %v102 = vld [vmem:[#allocation2 + $0x40] sm:$0xff]
    %v103 = vld [vmem:[#allocation2 + $0x48] sm:$0xff]
    %v104 = vld [vmem:[#allocation2 + $0x50] sm:$0xff]
    %v105 = vld [vmem:[#allocation2 + $0x58] sm:$0xff]
    %v106 = vld [vmem:[#allocation2 + $0x60] sm:$0xff]
    %v107 = vld [vmem:[#allocation2 + $0x68] sm:$0xff]
    %v108 = vld [vmem:[#allocation2 + $0x70] sm:$0xff]
    %v109 = vld [vmem:[#allocation2 + $0x78] sm:$0xff]
    %v110 = vlaneseq
    %v111 = vshrl.u32 %v110, 7
    %v112 = vsub.s32 0, %v111
    %v113 = vrot.slane %v93, %v112
    %114 = vmatprep.subr.mxu0 0.0
    %115 = vmatpush1.msra.mxu0 %v109
    %116 = vmatprep.subr.mxu0 0.0
    %117 = vmatpush1.msra.mxu0 %v108
    %118 = vmatprep.subr.mxu0 0.0
    %119 = vmatpush1.msra.mxu0 %v107
    %120 = vmatprep.subr.mxu0 0.0
    %121 = vmatpush1.msra.mxu0 %v106
    %122 = vmatprep.subr.mxu0 0.0
    %123 = vmatpush1.msra.mxu0 %v105
    %124 = vmatprep.subr.mxu0 0.0
    %125 = vmatpush1.msra.mxu0 %v104
    %126 = vmatprep.subr.mxu0 0.0
    %127 = vmatpush1.msra.mxu0 %v103
    %128 = vmatprep.subr.mxu0 0.0
    %129 = vmatpush1.msra.mxu0 %v102
    %130 = vmatprep.subr.mxu0 0.0
    %131 = vmatpush1.msra.mxu0 %v101
    %132 = vmatprep.subr.mxu0 0.0
    %133 = vmatpush1.msra.mxu0 %v100
    %134 = vmatprep.subr.mxu0 0.0
    %135 = vmatpush1.msra.mxu0 %v99
    %136 = vmatprep.subr.mxu0 0.0
    %137 = vmatpush1.msra.mxu0 %v98
    %138 = vmatprep.subr.mxu0 0.0
    %139 = vmatpush1.msra.mxu0 %v97
    %140 = vmatprep.subr.mxu0 0.0
    %141 = vmatpush1.msra.mxu0 %v96
    %142 = vmatprep.subr.mxu0 0.0
    %143 = vmatpush1.msra.mxu0 %v95
    %144 = vmatprep.subr.mxu0 0.0
    %145 = vmatpush1.msra.mxu0 %v94
    %146 = vmatprep.subr.mxu0 0.0
    %147 = vmatpush2.msra.mxu0 0.0
    %148 = vmatprep.subr.mxu0 0.0
    %149 = vmatpush2.msra.mxu0 0.0
    %150 = vmatprep.subr.mxu0 0.0
    %151 = vmatpush2.msra.mxu0 0.0
    %152 = vmatprep.subr.mxu0 0.0
    %153 = vmatpush2.msra.mxu0 0.0
    %154 = vmatprep.subr.mxu0 0.0
    %155 = vmatpush2.msra.mxu0 0.0
    %156 = vmatprep.subr.mxu0 0.0
    %157 = vmatpush2.msra.mxu0 0.0
    %158 = vmatprep.subr.mxu0 0.0
    %159 = vmatpush2.msra.mxu0 0.0
    %160 = vmatprep.subr.mxu0 0.0
    %161 = vmatpush2.msra.mxu0 0.0
    %162 = vmatprep.subr.mxu0 0.0
    %163 = vmatpush2.msra.mxu0 0.0
    %164 = vmatprep.subr.mxu0 0.0
    %165 = vmatpush2.msra.mxu0 0.0
    %166 = vmatprep.subr.mxu0 0.0
    %167 = vmatpush2.msra.mxu0 0.0
    %168 = vmatprep.subr.mxu0 0.0
    %169 = vmatpush2.msra.mxu0 0.0
    %170 = vmatprep.subr.mxu0 0.0
    %171 = vmatpush2.msra.mxu0 0.0
    %172 = vmatprep.subr.mxu0 0.0
    %173 = vmatpush2.msra.mxu0 0.0
    %174 = vmatprep.subr.mxu0 0.0
    %175 = vmatpush2.msra.mxu0 0.0
    %176 = vmatprep.subr.mxu0 0.0
    %177 = vmatpush2.msra.mxu0 0.0
    %178 = vmatprep.mubr.f32.mxu0 0.0
    %179 = vmatmul.mubr.f32.gmra.mxu0 %v89
    %v180 = vpop.f32.mrf.mxu0
    %v181 = vadd.f32 %v113, %v180
    %v182 = vpop.f32.mrf.mxu0
    %183 = vdwg.mxu0
    %v184 = vmax.f32 %v181, 0.0
    %v185 = vld [vmem:[%s5 + $0x1] sm:$0x1]
    %v186 = vld [vmem:[%s5 + $0x2] sm:$0x1]
    %vm187 = vcmask 64512
    %v189 = vsel %vm187, %v88, 0
    %191 = vmatprep.subr.mxu0 0.0
    %192 = vmatpush1.msra.mxu0 0.0
    %193 = vmatprep.subr.mxu0 0.0
    %194 = vmatpush1.msra.mxu0 0.0
    %195 = vmatprep.subr.mxu0 0.0
    %196 = vmatpush1.msra.mxu0 0.0
    %197 = vmatprep.subr.mxu0 0.0
    %198 = vmatpush1.msra.mxu0 0.0
    %199 = vmatprep.subr.mxu0 0.0
    %200 = vmatpush1.msra.mxu0 0.0
    %201 = vmatprep.subr.mxu0 0.0
    %202 = vmatpush1.msra.mxu0 0.0
    %203 = vmatprep.subr.mxu0 0.0
    %204 = vmatpush1.msra.mxu0 0.0
    %205 = vmatprep.subr.mxu0 0.0
    %206 = vmatpush1.msra.mxu0 0.0
    %207 = vmatprep.subr.mxu0 0.0
    %208 = vmatpush1.msra.mxu0 0.0
    %209 = vmatprep.subr.mxu0 0.0
    %210 = vmatpush1.msra.mxu0 0.0
    %211 = vmatprep.subr.mxu0 0.0
    %212 = vmatpush1.msra.mxu0 0.0
    %213 = vmatprep.subr.mxu0 0.0
    %214 = vmatpush1.msra.mxu0 0.0
    %215 = vmatprep.subr.mxu0 0.0
    %216 = vmatpush1.msra.mxu0 0.0
    %217 = vmatprep.subr.mxu0 0.0
    %218 = vmatpush1.msra.mxu0 0.0
    %219 = vmatprep.subr.mxu0 0.0
    %220 = vmatpush1.msra.mxu0 0.0
    %221 = vmatprep.subr.mxu0 0.0
    %222 = vmatpush1.msra.mxu0 %v184
    %223 = vmatprep.subr.mxu0 0.0
    %224 = vmatpush2.msra.mxu0 0.0
    %225 = vmatprep.subr.mxu0 0.0
    %226 = vmatpush2.msra.mxu0 0.0
    %227 = vmatprep.subr.mxu0 0.0
    %228 = vmatpush2.msra.mxu0 0.0
    %229 = vmatprep.subr.mxu0 0.0
    %230 = vmatpush2.msra.mxu0 0.0
    %231 = vmatprep.subr.mxu0 0.0
    %232 = vmatpush2.msra.mxu0 0.0
    %233 = vmatprep.subr.mxu0 0.0
    %234 = vmatpush2.msra.mxu0 0.0
    %235 = vmatprep.subr.mxu0 0.0
    %236 = vmatpush2.msra.mxu0 0.0
    %237 = vmatprep.subr.mxu0 0.0
    %238 = vmatpush2.msra.mxu0 0.0
    %239 = vmatprep.subr.mxu0 0.0
    %240 = vmatpush2.msra.mxu0 0.0
    %241 = vmatprep.subr.mxu0 0.0
    %242 = vmatpush2.msra.mxu0 0.0
    %243 = vmatprep.subr.mxu0 0.0
    %244 = vmatpush2.msra.mxu0 0.0
    %245 = vmatprep.subr.mxu0 0.0
    %246 = vmatpush2.msra.mxu0 0.0
    %247 = vmatprep.subr.mxu0 0.0
    %248 = vmatpush2.msra.mxu0 0.0
    %249 = vmatprep.subr.mxu0 0.0
    %250 = vmatpush2.msra.mxu0 0.0
    %251 = vmatprep.subr.mxu0 0.0
    %252 = vmatpush2.msra.mxu0 0.0
    %253 = vmatprep.subr.mxu0 0.0
    %254 = vmatpush2.msra.mxu0 0.0
    %255 = vmatprep.mubr.f32.mxu0 0.0
    %256 = vmatmul.mubr.f32.gmra.mxu0 %v189
    %v257 = vpop.f32.mrf.mxu0
    %v258 = vadd.f32 0.0, %v257
    %v259 = vpop.f32.mrf.mxu0
    %260 = vdwg.mxu0
    %v261 = vmul.f32 %v258, 0.125
    %v262 = vlaneseq
    %v263 = vshrl.u32 %v262, 7
    %v264 = vsub.s32 0, %v263
    %v265 = vrot.slane %v261, %v264
    %v266 = vsub.f32 %v184, %v265
    %v267 = vmul.f32 %v266, %v266
    %268 = vmatprep.subr.mxu0 0.0
    %269 = vmatpush1.msra.mxu0 0.0
    %270 = vmatprep.subr.mxu0 0.0
    %271 = vmatpush1.msra.mxu0 0.0
    %272 = vmatprep.subr.mxu0 0.0
    %273 = vmatpush1.msra.mxu0 0.0
    %274 = vmatprep.subr.mxu0 0.0
    %275 = vmatpush1.msra.mxu0 0.0
    %276 = vmatprep.subr.mxu0 0.0
    %277 = vmatpush1.msra.mxu0 0.0
    %278 = vmatprep.subr.mxu0 0.0
    %279 = vmatpush1.msra.mxu0 0.0
    %280 = vmatprep.subr.mxu0 0.0
    %281 = vmatpush1.msra.mxu0 0.0
    %282 = vmatprep.subr.mxu0 0.0
    %283 = vmatpush1.msra.mxu0 0.0
    %284 = vmatprep.subr.mxu0 0.0
    %285 = vmatpush1.msra.mxu0 0.0
    %286 = vmatprep.subr.mxu0 0.0
    %287 = vmatpush1.msra.mxu0 0.0
    %288 = vmatprep.subr.mxu0 0.0
    %289 = vmatpush1.msra.mxu0 0.0
    %290 = vmatprep.subr.mxu0 0.0
    %291 = vmatpush1.msra.mxu0 0.0
    %292 = vmatprep.subr.mxu0 0.0
    %293 = vmatpush1.msra.mxu0 0.0
    %294 = vmatprep.subr.mxu0 0.0
    %295 = vmatpush1.msra.mxu0 0.0
    %296 = vmatprep.subr.mxu0 0.0
    %297 = vmatpush1.msra.mxu0 0.0
    %298 = vmatprep.subr.mxu0 0.0
    %299 = vmatpush1.msra.mxu0 %v267
    %300 = vmatprep.subr.mxu0 0.0
    %301 = vmatpush2.msra.mxu0 0.0
    %302 = vmatprep.subr.mxu0 0.0
    %303 = vmatpush2.msra.mxu0 0.0
    %304 = vmatprep.subr.mxu0 0.0
    %305 = vmatpush2.msra.mxu0 0.0
    %306 = vmatprep.subr.mxu0 0.0
    %307 = vmatpush2.msra.mxu0 0.0
    %308 = vmatprep.subr.mxu0 0.0
    %309 = vmatpush2.msra.mxu0 0.0
    %310 = vmatprep.subr.mxu0 0.0
    %311 = vmatpush2.msra.mxu0 0.0
    %312 = vmatprep.subr.mxu0 0.0
    %313 = vmatpush2.msra.mxu0 0.0
    %314 = vmatprep.subr.mxu0 0.0
    %315 = vmatpush2.msra.mxu0 0.0
    %316 = vmatprep.subr.mxu0 0.0
    %317 = vmatpush2.msra.mxu0 0.0
    %318 = vmatprep.subr.mxu0 0.0
    %319 = vmatpush2.msra.mxu0 0.0
    %320 = vmatprep.subr.mxu0 0.0
    %321 = vmatpush2.msra.mxu0 0.0
    %322 = vmatprep.subr.mxu0 0.0
    %323 = vmatpush2.msra.mxu0 0.0
    %324 = vmatprep.subr.mxu0 0.0
    %325 = vmatpush2.msra.mxu0 0.0
    %326 = vmatprep.subr.mxu0 0.0
    %327 = vmatpush2.msra.mxu0 0.0
    %328 = vmatprep.subr.mxu0 0.0
    %329 = vmatpush2.msra.mxu0 0.0
    %330 = vmatprep.subr.mxu0 0.0
    %331 = vmatpush2.msra.mxu0 0.0
    %332 = vmatprep.mubr.f32.mxu0 0.0
    %333 = vmatmul.mubr.f32.gmra.mxu0 %v189
    %v334 = vpop.f32.mrf.mxu0
    %v335 = vadd.f32 0.0, %v334
    %v336 = vpop.f32.mrf.mxu0
    %337 = vdwg.mxu0
    %v338 = vmul.f32 %v335, 0.125
    %v339 = vadd.f32 %v338, 1e-05
    %v340 = vrsqrt.pop %v339
    %v341 = vmul.f32 %v340, %v185
    %v342 = vlaneseq
    %v343 = vshrl.u32 %v342, 7
    %v344 = vsub.s32 0, %v343
    %v345 = vrot.slane %v341, %v344
    %v346 = vmul.f32 %v266, %v345
    %v347 = vlaneseq
    %v348 = vshrl.u32 %v347, 7
    %v349 = vsub.s32 0, %v348
    %v350 = vrot.slane %v186, %v349
    %v351 = vadd.f32 %v346, %v350
    %s352 = sshll.u32 %s90, 4
    %353 = dma.done %s48, %s352
    %v354 = vld [vmem:[%s6] sm:$0x1]
    %v355 = vld [vmem:[#allocation3] sm:$0xff]
    %v356 = vld [vmem:[#allocation3 + $0x8] sm:$0xff]
    %v357 = vld [vmem:[#allocation3 + $0x10] sm:$0xff]
    %v358 = vld [vmem:[#allocation3 + $0x18] sm:$0xff]
    %v359 = vld [vmem:[#allocation3 + $0x20] sm:$0xff]
    %v360 = vld [vmem:[#allocation3 + $0x28] sm:$0xff]
    %v361 = vld [vmem:[#allocation3 + $0x30] sm:$0xff]
    %v362 = vld [vmem:[#allocation3 + $0x38] sm:$0xff]
    %v363 = vld [vmem:[#allocation3 + $0x40] sm:$0xff]
    %v364 = vld [vmem:[#allocation3 + $0x48] sm:$0xff]
    %v365 = vld [vmem:[#allocation3 + $0x50] sm:$0xff]
    %v366 = vld [vmem:[#allocation3 + $0x58] sm:$0xff]
    %v367 = vld [vmem:[#allocation3 + $0x60] sm:$0xff]
    %v368 = vld [vmem:[#allocation3 + $0x68] sm:$0xff]
    %v369 = vld [vmem:[#allocation3 + $0x70] sm:$0xff]
    %v370 = vld [vmem:[#allocation3 + $0x78] sm:$0xff]
    %v371 = vlaneseq
    %v372 = vshrl.u32 %v371, 7
    %v373 = vsub.s32 0, %v372
    %v374 = vrot.slane %v354, %v373
    %375 = vmatprep.subr.mxu0 0.0
    %376 = vmatpush1.msra.mxu0 %v370
    %377 = vmatprep.subr.mxu0 0.0
    %378 = vmatpush1.msra.mxu0 %v369
    %379 = vmatprep.subr.mxu0 0.0
    %380 = vmatpush1.msra.mxu0 %v368
    %381 = vmatprep.subr.mxu0 0.0
    %382 = vmatpush1.msra.mxu0 %v367
    %383 = vmatprep.subr.mxu0 0.0
    %384 = vmatpush1.msra.mxu0 %v366
    %385 = vmatprep.subr.mxu0 0.0
    %386 = vmatpush1.msra.mxu0 %v365
    %387 = vmatprep.subr.mxu0 0.0
    %388 = vmatpush1.msra.mxu0 %v364
    %389 = vmatprep.subr.mxu0 0.0
    %390 = vmatpush1.msra.mxu0 %v363
    %391 = vmatprep.subr.mxu0 0.0
    %392 = vmatpush1.msra.mxu0 %v362
    %393 = vmatprep.subr.mxu0 0.0
    %394 = vmatpush1.msra.mxu0 %v361
    %395 = vmatprep.subr.mxu0 0.0
    %396 = vmatpush1.msra.mxu0 %v360
    %397 = vmatprep.subr.mxu0 0.0
    %398 = vmatpush1.msra.mxu0 %v359
    %399 = vmatprep.subr.mxu0 0.0
    %400 = vmatpush1.msra.mxu0 %v358
    %401 = vmatprep.subr.mxu0 0.0
    %402 = vmatpush1.msra.mxu0 %v357
    %403 = vmatprep.subr.mxu0 0.0
    %404 = vmatpush1.msra.mxu0 %v356
    %405 = vmatprep.subr.mxu0 0.0
    %406 = vmatpush1.msra.mxu0 %v355
    %407 = vmatprep.subr.mxu0 0.0
    %408 = vmatpush2.msra.mxu0 0.0
    %409 = vmatprep.subr.mxu0 0.0
    %410 = vmatpush2.msra.mxu0 0.0
    %411 = vmatprep.subr.mxu0 0.0
    %412 = vmatpush2.msra.mxu0 0.0
    %413 = vmatprep.subr.mxu0 0.0
    %414 = vmatpush2.msra.mxu0 0.0
    %415 = vmatprep.subr.mxu0 0.0
    %416 = vmatpush2.msra.mxu0 0.0
    %417 = vmatprep.subr.mxu0 0.0
    %418 = vmatpush2.msra.mxu0 0.0
    %419 = vmatprep.subr.mxu0 0.0
    %420 = vmatpush2.msra.mxu0 0.0
    %421 = vmatprep.subr.mxu0 0.0
    %422 = vmatpush2.msra.mxu0 0.0
    %423 = vmatprep.subr.mxu0 0.0
    %424 = vmatpush2.msra.mxu0 0.0
    %425 = vmatprep.subr.mxu0 0.0
    %426 = vmatpush2.msra.mxu0 0.0
    %427 = vmatprep.subr.mxu0 0.0
    %428 = vmatpush2.msra.mxu0 0.0
    %429 = vmatprep.subr.mxu0 0.0
    %430 = vmatpush2.msra.mxu0 0.0
    %431 = vmatprep.subr.mxu0 0.0
    %432 = vmatpush2.msra.mxu0 0.0
    %433 = vmatprep.subr.mxu0 0.0
    %434 = vmatpush2.msra.mxu0 0.0
    %435 = vmatprep.subr.mxu0 0.0
    %436 = vmatpush2.msra.mxu0 0.0
    %437 = vmatprep.subr.mxu0 0.0
    %438 = vmatpush2.msra.mxu0 0.0
    %439 = vmatprep.mubr.f32.mxu0 0.0
    %440 = vmatmul.mubr.f32.gmra.mxu0 %v351
    %v441 = vpop.f32.mrf.mxu0
    %v442 = vadd.f32 %v374, %v441
    %v443 = vpop.f32.mrf.mxu0
    %444 = vdwg.mxu0
    %v445 = vmax.f32 %v442, 0.0
    %v446 = vld [vmem:[%s6 + $0x1] sm:$0x1]
    %v447 = vld [vmem:[%s6 + $0x2] sm:$0x1]
    %448 = vmatprep.subr.mxu0 0.0
    %449 = vmatpush1.msra.mxu0 0.0
    %450 = vmatprep.subr.mxu0 0.0
    %451 = vmatpush1.msra.mxu0 0.0
    %452 = vmatprep.subr.mxu0 0.0
    %453 = vmatpush1.msra.mxu0 0.0
    %454 = vmatprep.subr.mxu0 0.0
    %455 = vmatpush1.msra.mxu0 0.0
    %456 = vmatprep.subr.mxu0 0.0
    %457 = vmatpush1.msra.mxu0 0.0
    %458 = vmatprep.subr.mxu0 0.0
    %459 = vmatpush1.msra.mxu0 0.0
    %460 = vmatprep.subr.mxu0 0.0
    %461 = vmatpush1.msra.mxu0 0.0
    %462 = vmatprep.subr.mxu0 0.0
    %463 = vmatpush1.msra.mxu0 0.0
    %464 = vmatprep.subr.mxu0 0.0
    %465 = vmatpush1.msra.mxu0 0.0
    %466 = vmatprep.subr.mxu0 0.0
    %467 = vmatpush1.msra.mxu0 0.0
    %468 = vmatprep.subr.mxu0 0.0
    %469 = vmatpush1.msra.mxu0 0.0
    %470 = vmatprep.subr.mxu0 0.0
    %471 = vmatpush1.msra.mxu0 0.0
    %472 = vmatprep.subr.mxu0 0.0
    %473 = vmatpush1.msra.mxu0 0.0
    %474 = vmatprep.subr.mxu0 0.0
    %475 = vmatpush1.msra.mxu0 0.0
    %476 = vmatprep.subr.mxu0 0.0
    %477 = vmatpush1.msra.mxu0 0.0
    %478 = vmatprep.subr.mxu0 0.0
    %479 = vmatpush1.msra.mxu0 %v445
    %480 = vmatprep.subr.mxu0 0.0
    %481 = vmatpush2.msra.mxu0 0.0
    %482 = vmatprep.subr.mxu0 0.0
    %483 = vmatpush2.msra.mxu0 0.0
    %484 = vmatprep.subr.mxu0 0.0
    %485 = vmatpush2.msra.mxu0 0.0
    %486 = vmatprep.subr.mxu0 0.0
    %487 = vmatpush2.msra.mxu0 0.0
    %488 = vmatprep.subr.mxu0 0.0
    %489 = vmatpush2.msra.mxu0 0.0
    %490 = vmatprep.subr.mxu0 0.0
    %491 = vmatpush2.msra.mxu0 0.0
    %492 = vmatprep.subr.mxu0 0.0
    %493 = vmatpush2.msra.mxu0 0.0
    %494 = vmatprep.subr.mxu0 0.0
    %495 = vmatpush2.msra.mxu0 0.0
    %496 = vmatprep.subr.mxu0 0.0
    %497 = vmatpush2.msra.mxu0 0.0
    %498 = vmatprep.subr.mxu0 0.0
    %499 = vmatpush2.msra.mxu0 0.0
    %500 = vmatprep.subr.mxu0 0.0
    %501 = vmatpush2.msra.mxu0 0.0
    %502 = vmatprep.subr.mxu0 0.0
    %503 = vmatpush2.msra.mxu0 0.0
    %504 = vmatprep.subr.mxu0 0.0
    %505 = vmatpush2.msra.mxu0 0.0
    %506 = vmatprep.subr.mxu0 0.0
    %507 = vmatpush2.msra.mxu0 0.0
    %508 = vmatprep.subr.mxu0 0.0
    %509 = vmatpush2.msra.mxu0 0.0
    %510 = vmatprep.subr.mxu0 0.0
    %511 = vmatpush2.msra.mxu0 0.0
    %512 = vmatprep.mubr.f32.mxu0 0.0
    %513 = vmatmul.mubr.f32.gmra.mxu0 %v189
    %v514 = vpop.f32.mrf.mxu0
    %v515 = vadd.f32 0.0, %v514
    %v516 = vpop.f32.mrf.mxu0
    %517 = vdwg.mxu0
    %v518 = vmul.f32 %v515, 0.125
    %v519 = vlaneseq
    %v520 = vshrl.u32 %v519, 7
    %v521 = vsub.s32 0, %v520
    %v522 = vrot.slane %v518, %v521
    %v523 = vsub.f32 %v445, %v522
    %v524 = vmul.f32 %v523, %v523
    %525 = vmatprep.subr.mxu0 0.0
    %526 = vmatpush1.msra.mxu0 0.0
    %527 = vmatprep.subr.mxu0 0.0
    %528 = vmatpush1.msra.mxu0 0.0
    %529 = vmatprep.subr.mxu0 0.0
    %530 = vmatpush1.msra.mxu0 0.0
    %531 = vmatprep.subr.mxu0 0.0
    %532 = vmatpush1.msra.mxu0 0.0
    %533 = vmatprep.subr.mxu0 0.0
    %534 = vmatpush1.msra.mxu0 0.0
    %535 = vmatprep.subr.mxu0 0.0
    %536 = vmatpush1.msra.mxu0 0.0
    %537 = vmatprep.subr.mxu0 0.0
    %538 = vmatpush1.msra.mxu0 0.0
    %539 = vmatprep.subr.mxu0 0.0
    %540 = vmatpush1.msra.mxu0 0.0
    %541 = vmatprep.subr.mxu0 0.0
    %542 = vmatpush1.msra.mxu0 0.0
    %543 = vmatprep.subr.mxu0 0.0
    %544 = vmatpush1.msra.mxu0 0.0
    %545 = vmatprep.subr.mxu0 0.0
    %546 = vmatpush1.msra.mxu0 0.0
    %547 = vmatprep.subr.mxu0 0.0
    %548 = vmatpush1.msra.mxu0 0.0
    %549 = vmatprep.subr.mxu0 0.0
    %550 = vmatpush1.msra.mxu0 0.0
    %551 = vmatprep.subr.mxu0 0.0
    %552 = vmatpush1.msra.mxu0 0.0
    %553 = vmatprep.subr.mxu0 0.0
    %554 = vmatpush1.msra.mxu0 0.0
    %555 = vmatprep.subr.mxu0 0.0
    %556 = vmatpush1.msra.mxu0 %v524
    %557 = vmatprep.subr.mxu0 0.0
    %558 = vmatpush2.msra.mxu0 0.0
    %559 = vmatprep.subr.mxu0 0.0
    %560 = vmatpush2.msra.mxu0 0.0
    %561 = vmatprep.subr.mxu0 0.0
    %562 = vmatpush2.msra.mxu0 0.0
    %563 = vmatprep.subr.mxu0 0.0
    %564 = vmatpush2.msra.mxu0 0.0
    %565 = vmatprep.subr.mxu0 0.0
    %566 = vmatpush2.msra.mxu0 0.0
    %567 = vmatprep.subr.mxu0 0.0
    %568 = vmatpush2.msra.mxu0 0.0
    %569 = vmatprep.subr.mxu0 0.0
    %570 = vmatpush2.msra.mxu0 0.0
    %571 = vmatprep.subr.mxu0 0.0
    %572 = vmatpush2.msra.mxu0 0.0
    %573 = vmatprep.subr.mxu0 0.0
    %574 = vmatpush2.msra.mxu0 0.0
    %575 = vmatprep.subr.mxu0 0.0
    %576 = vmatpush2.msra.mxu0 0.0
    %577 = vmatprep.subr.mxu0 0.0
    %578 = vmatpush2.msra.mxu0 0.0
    %579 = vmatprep.subr.mxu0 0.0
    %580 = vmatpush2.msra.mxu0 0.0
    %581 = vmatprep.subr.mxu0 0.0
    %582 = vmatpush2.msra.mxu0 0.0
    %583 = vmatprep.subr.mxu0 0.0
    %584 = vmatpush2.msra.mxu0 0.0
    %585 = vmatprep.subr.mxu0 0.0
    %586 = vmatpush2.msra.mxu0 0.0
    %587 = vmatprep.subr.mxu0 0.0
    %588 = vmatpush2.msra.mxu0 0.0
    %589 = vmatprep.mubr.f32.mxu0 0.0
    %590 = vmatmul.mubr.f32.gmra.mxu0 %v189
    %v591 = vpop.f32.mrf.mxu0
    %v592 = vadd.f32 0.0, %v591
    %v593 = vpop.f32.mrf.mxu0
    %594 = vdwg.mxu0
    %v595 = vmul.f32 %v592, 0.125
    %v596 = vadd.f32 %v595, 1e-05
    %v597 = vrsqrt.pop %v596
    %v598 = vmul.f32 %v597, %v446
    %v599 = vlaneseq
    %v600 = vshrl.u32 %v599, 7
    %v601 = vsub.s32 0, %v600
    %v602 = vrot.slane %v598, %v601
    %v603 = vmul.f32 %v523, %v602
    %v604 = vlaneseq
    %v605 = vshrl.u32 %v604, 7
    %v606 = vsub.s32 0, %v605
    %v607 = vrot.slane %v447, %v606
    %v608 = vadd.f32 %v603, %v607
    %s609 = sshll.u32 %s90, 4
    %610 = dma.done %s60, %s609
    %v611 = vld [vmem:[%s7] sm:$0x1]
    %v612 = vld [vmem:[#allocation4] sm:$0xff]
    %v613 = vld [vmem:[#allocation4 + $0x8] sm:$0xff]
    %v614 = vld [vmem:[#allocation4 + $0x10] sm:$0xff]
    %v615 = vld [vmem:[#allocation4 + $0x18] sm:$0xff]
    %v616 = vld [vmem:[#allocation4 + $0x20] sm:$0xff]
    %v617 = vld [vmem:[#allocation4 + $0x28] sm:$0xff]
    %v618 = vld [vmem:[#allocation4 + $0x30] sm:$0xff]
    %v619 = vld [vmem:[#allocation4 + $0x38] sm:$0xff]
    %v620 = vld [vmem:[#allocation4 + $0x40] sm:$0xff]
    %v621 = vld [vmem:[#allocation4 + $0x48] sm:$0xff]
    %v622 = vld [vmem:[#allocation4 + $0x50] sm:$0xff]
    %v623 = vld [vmem:[#allocation4 + $0x58] sm:$0xff]
    %v624 = vld [vmem:[#allocation4 + $0x60] sm:$0xff]
    %v625 = vld [vmem:[#allocation4 + $0x68] sm:$0xff]
    %v626 = vld [vmem:[#allocation4 + $0x70] sm:$0xff]
    %v627 = vld [vmem:[#allocation4 + $0x78] sm:$0xff]
    %v628 = vlaneseq
    %v629 = vshrl.u32 %v628, 7
    %v630 = vsub.s32 0, %v629
    %v631 = vrot.slane %v611, %v630
    %632 = vmatprep.subr.mxu0 0.0
    %633 = vmatpush1.msra.mxu0 %v627
    %634 = vmatprep.subr.mxu0 0.0
    %635 = vmatpush1.msra.mxu0 %v626
    %636 = vmatprep.subr.mxu0 0.0
    %637 = vmatpush1.msra.mxu0 %v625
    %638 = vmatprep.subr.mxu0 0.0
    %639 = vmatpush1.msra.mxu0 %v624
    %640 = vmatprep.subr.mxu0 0.0
    %641 = vmatpush1.msra.mxu0 %v623
    %642 = vmatprep.subr.mxu0 0.0
    %643 = vmatpush1.msra.mxu0 %v622
    %644 = vmatprep.subr.mxu0 0.0
    %645 = vmatpush1.msra.mxu0 %v621
    %646 = vmatprep.subr.mxu0 0.0
    %647 = vmatpush1.msra.mxu0 %v620
    %648 = vmatprep.subr.mxu0 0.0
    %649 = vmatpush1.msra.mxu0 %v619
    %650 = vmatprep.subr.mxu0 0.0
    %651 = vmatpush1.msra.mxu0 %v618
    %652 = vmatprep.subr.mxu0 0.0
    %653 = vmatpush1.msra.mxu0 %v617
    %654 = vmatprep.subr.mxu0 0.0
    %655 = vmatpush1.msra.mxu0 %v616
    %656 = vmatprep.subr.mxu0 0.0
    %657 = vmatpush1.msra.mxu0 %v615
    %658 = vmatprep.subr.mxu0 0.0
    %659 = vmatpush1.msra.mxu0 %v614
    %660 = vmatprep.subr.mxu0 0.0
    %661 = vmatpush1.msra.mxu0 %v613
    %662 = vmatprep.subr.mxu0 0.0
    %663 = vmatpush1.msra.mxu0 %v612
    %664 = vmatprep.subr.mxu0 0.0
    %665 = vmatpush2.msra.mxu0 0.0
    %666 = vmatprep.subr.mxu0 0.0
    %667 = vmatpush2.msra.mxu0 0.0
    %668 = vmatprep.subr.mxu0 0.0
    %669 = vmatpush2.msra.mxu0 0.0
    %670 = vmatprep.subr.mxu0 0.0
    %671 = vmatpush2.msra.mxu0 0.0
    %672 = vmatprep.subr.mxu0 0.0
    %673 = vmatpush2.msra.mxu0 0.0
    %674 = vmatprep.subr.mxu0 0.0
    %675 = vmatpush2.msra.mxu0 0.0
    %676 = vmatprep.subr.mxu0 0.0
    %677 = vmatpush2.msra.mxu0 0.0
    %678 = vmatprep.subr.mxu0 0.0
    %679 = vmatpush2.msra.mxu0 0.0
    %680 = vmatprep.subr.mxu0 0.0
    %681 = vmatpush2.msra.mxu0 0.0
    %682 = vmatprep.subr.mxu0 0.0
    %683 = vmatpush2.msra.mxu0 0.0
    %684 = vmatprep.subr.mxu0 0.0
    %685 = vmatpush2.msra.mxu0 0.0
    %686 = vmatprep.subr.mxu0 0.0
    %687 = vmatpush2.msra.mxu0 0.0
    %688 = vmatprep.subr.mxu0 0.0
    %689 = vmatpush2.msra.mxu0 0.0
    %690 = vmatprep.subr.mxu0 0.0
    %691 = vmatpush2.msra.mxu0 0.0
    %692 = vmatprep.subr.mxu0 0.0
    %693 = vmatpush2.msra.mxu0 0.0
    %694 = vmatprep.subr.mxu0 0.0
    %695 = vmatpush2.msra.mxu0 0.0
    %696 = vmatprep.mubr.f32.mxu0 0.0
    %697 = vmatmul.mubr.f32.gmra.mxu0 %v608
    %v698 = vpop.f32.mrf.mxu0
    %v699 = vadd.f32 %v631, %v698
    %v700 = vpop.f32.mrf.mxu0
    %701 = vdwg.mxu0
    %v702 = vmax.f32 %v699, 0.0
    %v703 = vld [vmem:[%s7 + $0x1] sm:$0x1]
    %v704 = vld [vmem:[%s7 + $0x2] sm:$0x1]
    %705 = vmatprep.subr.mxu0 0.0
    %706 = vmatpush1.msra.mxu0 0.0
    %707 = vmatprep.subr.mxu0 0.0
    %708 = vmatpush1.msra.mxu0 0.0
    %709 = vmatprep.subr.mxu0 0.0
    %710 = vmatpush1.msra.mxu0 0.0
    %711 = vmatprep.subr.mxu0 0.0
    %712 = vmatpush1.msra.mxu0 0.0
    %713 = vmatprep.subr.mxu0 0.0
    %714 = vmatpush1.msra.mxu0 0.0
    %715 = vmatprep.subr.mxu0 0.0
    %716 = vmatpush1.msra.mxu0 0.0
    %717 = vmatprep.subr.mxu0 0.0
    %718 = vmatpush1.msra.mxu0 0.0
    %719 = vmatprep.subr.mxu0 0.0
    %720 = vmatpush1.msra.mxu0 0.0
    %721 = vmatprep.subr.mxu0 0.0
    %722 = vmatpush1.msra.mxu0 0.0
    %723 = vmatprep.subr.mxu0 0.0
    %724 = vmatpush1.msra.mxu0 0.0
    %725 = vmatprep.subr.mxu0 0.0
    %726 = vmatpush1.msra.mxu0 0.0
    %727 = vmatprep.subr.mxu0 0.0
    %728 = vmatpush1.msra.mxu0 0.0
    %729 = vmatprep.subr.mxu0 0.0
    %730 = vmatpush1.msra.mxu0 0.0
    %731 = vmatprep.subr.mxu0 0.0
    %732 = vmatpush1.msra.mxu0 0.0
    %733 = vmatprep.subr.mxu0 0.0
    %734 = vmatpush1.msra.mxu0 0.0
    %735 = vmatprep.subr.mxu0 0.0
    %736 = vmatpush1.msra.mxu0 %v702
    %737 = vmatprep.subr.mxu0 0.0
    %738 = vmatpush2.msra.mxu0 0.0
    %739 = vmatprep.subr.mxu0 0.0
    %740 = vmatpush2.msra.mxu0 0.0
    %741 = vmatprep.subr.mxu0 0.0
    %742 = vmatpush2.msra.mxu0 0.0
    %743 = vmatprep.subr.mxu0 0.0
    %744 = vmatpush2.msra.mxu0 0.0
    %745 = vmatprep.subr.mxu0 0.0
    %746 = vmatpush2.msra.mxu0 0.0
    %747 = vmatprep.subr.mxu0 0.0
    %748 = vmatpush2.msra.mxu0 0.0
    %749 = vmatprep.subr.mxu0 0.0
    %750 = vmatpush2.msra.mxu0 0.0
    %751 = vmatprep.subr.mxu0 0.0
    %752 = vmatpush2.msra.mxu0 0.0
    %753 = vmatprep.subr.mxu0 0.0
    %754 = vmatpush2.msra.mxu0 0.0
    %755 = vmatprep.subr.mxu0 0.0
    %756 = vmatpush2.msra.mxu0 0.0
    %757 = vmatprep.subr.mxu0 0.0
    %758 = vmatpush2.msra.mxu0 0.0
    %759 = vmatprep.subr.mxu0 0.0
    %760 = vmatpush2.msra.mxu0 0.0
    %761 = vmatprep.subr.mxu0 0.0
    %762 = vmatpush2.msra.mxu0 0.0
    %763 = vmatprep.subr.mxu0 0.0
    %764 = vmatpush2.msra.mxu0 0.0
    %765 = vmatprep.subr.mxu0 0.0
    %766 = vmatpush2.msra.mxu0 0.0
    %767 = vmatprep.subr.mxu0 0.0
    %768 = vmatpush2.msra.mxu0 0.0
    %769 = vmatprep.mubr.f32.mxu0 0.0
    %770 = vmatmul.mubr.f32.gmra.mxu0 %v189
    %v771 = vpop.f32.mrf.mxu0
    %v772 = vadd.f32 0.0, %v771
    %v773 = vpop.f32.mrf.mxu0
    %774 = vdwg.mxu0
    %v775 = vmul.f32 %v772, 0.125
    %v776 = vlaneseq
    %v777 = vshrl.u32 %v776, 7
    %v778 = vsub.s32 0, %v777
    %v779 = vrot.slane %v775, %v778
    %v780 = vsub.f32 %v702, %v779
    %v781 = vmul.f32 %v780, %v780
    %782 = vmatprep.subr.mxu0 0.0
    %783 = vmatpush1.msra.mxu0 0.0
    %784 = vmatprep.subr.mxu0 0.0
    %785 = vmatpush1.msra.mxu0 0.0
    %786 = vmatprep.subr.mxu0 0.0
    %787 = vmatpush1.msra.mxu0 0.0
    %788 = vmatprep.subr.mxu0 0.0
    %789 = vmatpush1.msra.mxu0 0.0
    %790 = vmatprep.subr.mxu0 0.0
    %791 = vmatpush1.msra.mxu0 0.0
    %792 = vmatprep.subr.mxu0 0.0
    %793 = vmatpush1.msra.mxu0 0.0
    %794 = vmatprep.subr.mxu0 0.0
    %795 = vmatpush1.msra.mxu0 0.0
    %796 = vmatprep.subr.mxu0 0.0
    %797 = vmatpush1.msra.mxu0 0.0
    %798 = vmatprep.subr.mxu0 0.0
    %799 = vmatpush1.msra.mxu0 0.0
    %800 = vmatprep.subr.mxu0 0.0
    %801 = vmatpush1.msra.mxu0 0.0
    %802 = vmatprep.subr.mxu0 0.0
    %803 = vmatpush1.msra.mxu0 0.0
    %804 = vmatprep.subr.mxu0 0.0
    %805 = vmatpush1.msra.mxu0 0.0
    %806 = vmatprep.subr.mxu0 0.0
    %807 = vmatpush1.msra.mxu0 0.0
    %808 = vmatprep.subr.mxu0 0.0
    %809 = vmatpush1.msra.mxu0 0.0
    %810 = vmatprep.subr.mxu0 0.0
    %811 = vmatpush1.msra.mxu0 0.0
    %812 = vmatprep.subr.mxu0 0.0
    %813 = vmatpush1.msra.mxu0 %v781
    %814 = vmatprep.subr.mxu0 0.0
    %815 = vmatpush2.msra.mxu0 0.0
    %816 = vmatprep.subr.mxu0 0.0
    %817 = vmatpush2.msra.mxu0 0.0
    %818 = vmatprep.subr.mxu0 0.0
    %819 = vmatpush2.msra.mxu0 0.0
    %820 = vmatprep.subr.mxu0 0.0
    %821 = vmatpush2.msra.mxu0 0.0
    %822 = vmatprep.subr.mxu0 0.0
    %823 = vmatpush2.msra.mxu0 0.0
    %824 = vmatprep.subr.mxu0 0.0
    %825 = vmatpush2.msra.mxu0 0.0
    %826 = vmatprep.subr.mxu0 0.0
    %827 = vmatpush2.msra.mxu0 0.0
    %828 = vmatprep.subr.mxu0 0.0
    %829 = vmatpush2.msra.mxu0 0.0
    %830 = vmatprep.subr.mxu0 0.0
    %831 = vmatpush2.msra.mxu0 0.0
    %832 = vmatprep.subr.mxu0 0.0
    %833 = vmatpush2.msra.mxu0 0.0
    %834 = vmatprep.subr.mxu0 0.0
    %835 = vmatpush2.msra.mxu0 0.0
    %836 = vmatprep.subr.mxu0 0.0
    %837 = vmatpush2.msra.mxu0 0.0
    %838 = vmatprep.subr.mxu0 0.0
    %839 = vmatpush2.msra.mxu0 0.0
    %840 = vmatprep.subr.mxu0 0.0
    %841 = vmatpush2.msra.mxu0 0.0
    %842 = vmatprep.subr.mxu0 0.0
    %843 = vmatpush2.msra.mxu0 0.0
    %844 = vmatprep.subr.mxu0 0.0
    %845 = vmatpush2.msra.mxu0 0.0
    %846 = vmatprep.mubr.f32.mxu0 0.0
    %847 = vmatmul.mubr.f32.gmra.mxu0 %v189
    %v848 = vpop.f32.mrf.mxu0
    %v849 = vadd.f32 0.0, %v848
    %v850 = vpop.f32.mrf.mxu0
    %851 = vdwg.mxu0
    %v852 = vmul.f32 %v849, 0.125
    %v853 = vadd.f32 %v852, 1e-05
    %v854 = vrsqrt.pop %v853
    %v855 = vmul.f32 %v854, %v703
    %v856 = vlaneseq
    %v857 = vshrl.u32 %v856, 7
    %v858 = vsub.s32 0, %v857
    %v859 = vrot.slane %v855, %v858
    %v860 = vmul.f32 %v780, %v859
    %v861 = vlaneseq
    %v862 = vshrl.u32 %v861, 7
    %v863 = vsub.s32 0, %v862
    %v864 = vrot.slane %v704, %v863
    %v865 = vadd.f32 %v860, %v864
    %s866 = sshll.u32 %s90, 4
    %867 = dma.done %s72, %s866
    %v868 = vld [vmem:[%s8] sm:$0x1]
    %v869 = vld [vmem:[#allocation5] sm:$0xff]
    %v870 = vld [vmem:[#allocation5 + $0x8] sm:$0xff]
    %v871 = vld [vmem:[#allocation5 + $0x10] sm:$0xff]
    %v872 = vld [vmem:[#allocation5 + $0x18] sm:$0xff]
    %v873 = vld [vmem:[#allocation5 + $0x20] sm:$0xff]
    %v874 = vld [vmem:[#allocation5 + $0x28] sm:$0xff]
    %v875 = vld [vmem:[#allocation5 + $0x30] sm:$0xff]
    %v876 = vld [vmem:[#allocation5 + $0x38] sm:$0xff]
    %v877 = vld [vmem:[#allocation5 + $0x40] sm:$0xff]
    %v878 = vld [vmem:[#allocation5 + $0x48] sm:$0xff]
    %v879 = vld [vmem:[#allocation5 + $0x50] sm:$0xff]
    %v880 = vld [vmem:[#allocation5 + $0x58] sm:$0xff]
    %v881 = vld [vmem:[#allocation5 + $0x60] sm:$0xff]
    %v882 = vld [vmem:[#allocation5 + $0x68] sm:$0xff]
    %v883 = vld [vmem:[#allocation5 + $0x70] sm:$0xff]
    %v884 = vld [vmem:[#allocation5 + $0x78] sm:$0xff]
    %v886 = vlaneseq
    %v887 = vshrl.u32 %v886, 7
    %v888 = vsub.s32 0, %v887
    %v889 = vrot.slane %v868, %v888
    %891 = vmatprep.subr.mxu0 0.0
    %892 = vmatpush1.msra.mxu0 %v884
    %893 = vmatprep.subr.mxu0 0.0
    %894 = vmatpush1.msra.mxu0 %v883
    %895 = vmatprep.subr.mxu0 0.0
    %896 = vmatpush1.msra.mxu0 %v882
    %897 = vmatprep.subr.mxu0 0.0
    %898 = vmatpush1.msra.mxu0 %v881
    %899 = vmatprep.subr.mxu0 0.0
    %900 = vmatpush1.msra.mxu0 %v880
    %901 = vmatprep.subr.mxu0 0.0
    %902 = vmatpush1.msra.mxu0 %v879
    %903 = vmatprep.subr.mxu0 0.0
    %904 = vmatpush1.msra.mxu0 %v878
    %905 = vmatprep.subr.mxu0 0.0
    %906 = vmatpush1.msra.mxu0 %v877
    %907 = vmatprep.subr.mxu0 0.0
    %908 = vmatpush1.msra.mxu0 %v876
    %909 = vmatprep.subr.mxu0 0.0
    %910 = vmatpush1.msra.mxu0 %v875
    %911 = vmatprep.subr.mxu0 0.0
    %912 = vmatpush1.msra.mxu0 %v874
    %913 = vmatprep.subr.mxu0 0.0
    %914 = vmatpush1.msra.mxu0 %v873
    %915 = vmatprep.subr.mxu0 0.0
    %916 = vmatpush1.msra.mxu0 %v872
    %917 = vmatprep.subr.mxu0 0.0
    %918 = vmatpush1.msra.mxu0 %v871
    %919 = vmatprep.subr.mxu0 0.0
    %920 = vmatpush1.msra.mxu0 %v870
    %921 = vmatprep.subr.mxu0 0.0
    %922 = vmatpush1.msra.mxu0 %v869
    %923 = vmatprep.subr.mxu0 0.0
    %924 = vmatpush2.msra.mxu0 0.0
    %925 = vmatprep.subr.mxu0 0.0
    %926 = vmatpush2.msra.mxu0 0.0
    %927 = vmatprep.subr.mxu0 0.0
    %928 = vmatpush2.msra.mxu0 0.0
    %929 = vmatprep.subr.mxu0 0.0
    %930 = vmatpush2.msra.mxu0 0.0
    %931 = vmatprep.subr.mxu0 0.0
    %932 = vmatpush2.msra.mxu0 0.0
    %933 = vmatprep.subr.mxu0 0.0
    %934 = vmatpush2.msra.mxu0 0.0
    %935 = vmatprep.subr.mxu0 0.0
    %936 = vmatpush2.msra.mxu0 0.0
    %937 = vmatprep.subr.mxu0 0.0
    %938 = vmatpush2.msra.mxu0 0.0
    %939 = vmatprep.subr.mxu0 0.0
    %940 = vmatpush2.msra.mxu0 0.0
    %941 = vmatprep.subr.mxu0 0.0
    %942 = vmatpush2.msra.mxu0 0.0
    %943 = vmatprep.subr.mxu0 0.0
    %944 = vmatpush2.msra.mxu0 0.0
    %945 = vmatprep.subr.mxu0 0.0
    %946 = vmatpush2.msra.mxu0 0.0
    %947 = vmatprep.subr.mxu0 0.0
    %948 = vmatpush2.msra.mxu0 0.0
    %949 = vmatprep.subr.mxu0 0.0
    %950 = vmatpush2.msra.mxu0 0.0
    %951 = vmatprep.subr.mxu0 0.0
    %952 = vmatpush2.msra.mxu0 0.0
    %953 = vmatprep.subr.mxu0 0.0
    %954 = vmatpush2.msra.mxu0 0.0
    %955 = vmatprep.mubr.f32.mxu0 0.0
    %956 = vmatmul.mubr.f32.gmra.mxu0 %v865
    %v957 = vpop.f32.mrf.mxu0
    %v958 = vadd.f32 %v889, %v957
    %v959 = vpop.f32.mrf.mxu0
    %960 = vdwg.mxu0
    %961 = vst [vmem:[#allocation10] sm:$0xff] %v958
    // Predicated region
    $region42: #{tpu_custom_call.1} parent=1 // pred_check
      _
    $region43: #{tpu_custom_call.1} parent=1 // pred_check_branch
      %963 = sbr.rel (0) target = $region45
    $region44: #{tpu_custom_call.1} parent=1 // pred_region
      %s965 = ssub.s32 128, 128
      %966 = vsyncadd [#allocation9], %s965
      %s968 = sshll.u32 [#allocation10], 4
      %s969 = int_to_ptr.vmem [resolvable:$true] %s968
      %971 = dma.vmem_to_hbm [thread:$0]  %s969, 128, %s9, [#allocation9]
    $region45: #{tpu_custom_call.1} parent=1 // pred_fallthru
      _
    // Predicated region
    $region46: #{tpu_custom_call.1} parent=1 // pred_check
      _
    $region47: #{tpu_custom_call.1} parent=1 // pred_check_branch
      %973 = sbr.rel (0) target = $region49
    $region48: #{tpu_custom_call.1} parent=1 // pred_region
      %974 = dma.done [#allocation9], 128
    $region49: #{tpu_custom_call.1} parent=1 // pred_fallthru
      _
    %975 = vsyncpa [#allocation8], 1
    %976 = vsyncpa [#allocation9], 1
  %977 = vsyncmov [#allocation6]
  %s978 = vpop.sfrf %977
  %p979 = scmp.eq.s32.totalorder %s978, 0
  %p980 = pneg %p979
  %982 = shalt.err (%p980)
  %s983 = scalar_lea.sflag [#allocation6], 1
  %984 = vsyncmov %s983
  %s985 = vpop.sfrf %984
  %p986 = scmp.eq.s32.totalorder %s985, 0
  %p987 = pneg %p986
  %989 = shalt.err (%p987)
  %s990 = scalar_lea.sflag [#allocation6], 2
  %991 = vsyncmov %s990
  %s992 = vpop.sfrf %991
  %p993 = scmp.eq.s32.totalorder %s992, 0
  %p994 = pneg %p993
  %996 = shalt.err (%p994)
  %s997 = scalar_lea.sflag [#allocation6], 3
  %998 = vsyncmov %s997
  %s999 = vpop.sfrf %998
  %p1000 = scmp.eq.s32.totalorder %s999, 0
  %p1001 = pneg %p1000
  %1003 = shalt.err (%p1001)

</llo_original>
